<compile_context>
chip_gen: v5e
topology: v5e:2x2
jax: 0.10.0
libtpu: 0.0.40
codegen_flags: <defaults>
</compile_context>

<pallas_src>
import jax
import jax.numpy as jnp
from jax import lax
from jax.experimental import pallas as pl
from jax.experimental.pallas import tpu as pltpu


def _mlp_kernel(x_ref, w1_ref, b1_ref, w2_ref, b2_ref, w3_ref, b3_ref, o_ref):
    # ---- fc1 + ReLU (bf16 MXU inputs, f32 accumulation) -------------------
    x = x_ref[...].astype(jnp.bfloat16)
    h1 = jnp.dot(x, w1_ref[...], preferred_element_type=jnp.float32)
    h1 = jnp.maximum(h1 + b1_ref[...], 0.0).astype(jnp.bfloat16)

    # ---- fc2 + ReLU --------------------------------------------------------
    h2 = jnp.dot(h1, w2_ref[...], preferred_element_type=jnp.float32)
    h2 = jnp.maximum(h2 + b2_ref[...], 0.0).astype(jnp.bfloat16)

    # ---- fc3 ---------------------------------------------------------------
    logits = jnp.dot(h2, w3_ref[...], preferred_element_type=jnp.float32)
    logits = logits + b3_ref[...]

    # ---- 2-class log_softmax, closed form (no cross-lane reductions) -------
    #   out[:, 0] = -softplus(z1 - z0),  out[:, 1] = -softplus(z0 - z1)
    d = logits[:, 1:2] - logits[:, 0:1]                        # (TB, 1)
    col = lax.broadcasted_iota(jnp.int32, logits.shape, 1)     # (TB, 2)
    signed = jnp.where(col == 0, d, -d)                        # (TB, 2)
    # stable softplus: max(x, 0) + log(1 + exp(-|x|))
    sp = jnp.maximum(signed, 0.0) + jnp.log(1.0 + jnp.exp(-jnp.abs(signed)))
    o_ref[...] = (-sp).astype(o_ref.dtype)


def classifier_3nn_forward(x, params):
    """x: (B, 48) float32 -> (B, 2) float32 log-probabilities."""
    w1, b1, w2, b2, w3, b3 = params
    B, F = x.shape
    assert F == 48

    # Weights to bf16 once (biases stay f32, added after f32 accumulation).
    w1 = w1.astype(jnp.bfloat16)
    w2 = w2.astype(jnp.bfloat16)
    w3 = w3.astype(jnp.bfloat16)

    # Batch tile: up to 1024 rows per grid step (~1 KB VMEM / row for x/h1/h2,
    # well under the 16/32 MiB scoped budgets), 8-row aligned for small B.
    TB = min(1024, max(8, pl.cdiv(B, 8) * 8))
    B_pad = pl.cdiv(B, TB) * TB
    if B_pad != B:
        x = jnp.pad(x, ((0, B_pad - B), (0, 0)))
    grid = (B_pad // TB,)

    def const2d(a):  # whole array, VMEM-resident across grid steps
        return pl.BlockSpec(a.shape, lambda i: (0, 0))

    flops = 2 * B_pad * (48 * 128 + 128 * 64 + 64 * 2)
    bytes_accessed = (B_pad * (48 + 2) * 4
                      + 2 * (48 * 128 + 128 * 64 + 64 * 2)   # bf16 weights
                      + 4 * (128 + 64 + 2))                  # f32 biases
    cost = pl.CostEstimate(flops=flops,
                           transcendentals=2 * B_pad,
                           bytes_accessed=bytes_accessed)

    out = pl.pallas_call(
        _mlp_kernel,
        out_shape=jax.ShapeDtypeStruct((B_pad, 2), jnp.float32),
        grid=grid,
        in_specs=[pl.BlockSpec((TB, 48), lambda i: (i, 0)),
                  const2d(w1), const2d(b1),
                  const2d(w2), const2d(b2),
                  const2d(w3), const2d(b3)],
        out_specs=pl.BlockSpec((TB, 2), lambda i: (i, 0)),
        compiler_params=pltpu.CompilerParams(
            dimension_semantics=("parallel",),
            vmem_limit_bytes=32 * 1024 * 1024),
        cost_estimate=cost,
    )(x, w1, b1, w2, b2, w3, b3)
    return out[:B]


def init_params(key):
    """Deterministic init matching the PyTorch layer shapes.

    PyTorch nn.Linear(in, out) has weight (out, in); we store the transpose
    (in, out) so the kernel does x @ W.  Uniform(-1/sqrt(in), 1/sqrt(in)),
    same distribution family as PyTorch's default init.
    """
    dims = [(48, 128), (128, 64), (64, 2)]
    params = []
    for (din, dout) in dims:
        key, kw, kb = jax.random.split(key, 3)
        bound = 1.0 / jnp.sqrt(jnp.float32(din))
        w = jax.random.uniform(kw, (din, dout), jnp.float32, -bound, bound)
        b = jax.random.uniform(kb, (1, dout), jnp.float32, -bound, bound)
        params += [w, b]
    return tuple(params)


def reference_forward(x, params):
    w1, b1, w2, b2, w3, b3 = params
    h = jnp.maximum(x @ w1 + b1, 0.0)
    h = jnp.maximum(h @ w2 + b2, 0.0)
    logits = h @ w3 + b3
    return jax.nn.log_softmax(logits, axis=1)


if __name__ == "__main__":
    key = jax.random.PRNGKey(0)
    key, kx = jax.random.split(key)
    B = 8
    x = jax.random.normal(kx, (B, 48), dtype=jnp.float32)
    params = init_params(key)

    out = classifier_3nn_forward(x, params)
    out = jax.block_until_ready(out)

    ref = reference_forward(x, params)  # full-f32 reference
    assert out.shape == (B, 2)
    # bf16 MXU inputs with f32 accumulation -> relaxed tolerance vs f32 ref.
    assert jnp.allclose(out, ref, atol=1e-2, rtol=1e-2), "mismatch vs reference"
    print("KERNEL_OK")
</pallas_src>

<mosaic_0001>
module attributes {stable_mosaic.version = 11 : i64} {
  func.func @_mlp_kernel(%arg0: i32, %arg1: memref<8x48xf32, #tpu.memory_space<vmem>>, %arg2: memref<48x128xbf16, #tpu.memory_space<vmem>>, %arg3: memref<1x128xf32, #tpu.memory_space<vmem>>, %arg4: memref<128x64xbf16, #tpu.memory_space<vmem>>, %arg5: memref<1x64xf32, #tpu.memory_space<vmem>>, %arg6: memref<64x2xbf16, #tpu.memory_space<vmem>>, %arg7: memref<1x2xf32, #tpu.memory_space<vmem>>, %arg8: memref<8x2xf32, #tpu.memory_space<vmem>>) attributes {dimension_semantics = [#tpu.dimension_semantics<parallel>], iteration_bounds = array<i64: 1>, scalar_prefetch = 0 : i64, scratch_operands = 0 : i64, tpu.core_type = #tpu.core_type<tc>, window_params = [{transform_indices = @transform_0, window_bounds = array<i64: 8, 48>}, {pipeline_mode = #tpu.pipeline_mode<synchronous>, transform_indices = @transform_1, window_bounds = array<i64: 48, 128>}, {pipeline_mode = #tpu.pipeline_mode<synchronous>, transform_indices = @transform_2, window_bounds = array<i64: 1, 128>}, {pipeline_mode = #tpu.pipeline_mode<synchronous>, transform_indices = @transform_3, window_bounds = array<i64: 128, 64>}, {pipeline_mode = #tpu.pipeline_mode<synchronous>, transform_indices = @transform_4, window_bounds = array<i64: 1, 64>}, {pipeline_mode = #tpu.pipeline_mode<synchronous>, transform_indices = @transform_5, window_bounds = array<i64: 64, 2>}, {pipeline_mode = #tpu.pipeline_mode<synchronous>, transform_indices = @transform_6, window_bounds = array<i64: 1, 2>}, {transform_indices = @transform_7, window_bounds = array<i64: 8, 2>}]} {
    %c0 = arith.constant 0 : index
    %c0_0 = arith.constant 0 : index
    %0 = vector.load %arg1[%c0, %c0_0] : memref<8x48xf32, #tpu.memory_space<vmem>>, vector<8x48xf32>
    %1 = arith.truncf %0 : vector<8x48xf32> to vector<8x48xbf16>
    %c0_1 = arith.constant 0 : index
    %c0_2 = arith.constant 0 : index
    %2 = vector.load %arg2[%c0_1, %c0_2] : memref<48x128xbf16, #tpu.memory_space<vmem>>, vector<48x128xbf16>
    %cst = arith.constant dense<0.000000e+00> : vector<8x128xf32>
    %3 = tpu.matmul %1, %2, %cst {dimension_numbers = #tpu.dot_dimension_numbers<[1], [0], [0], [1], [0, 0, 1, 1], [], []>} : vector<8x48xbf16>, vector<48x128xbf16>, vector<8x128xf32> -> vector<8x128xf32>
    %c0_3 = arith.constant 0 : index
    %c0_4 = arith.constant 0 : index
    %4 = vector.load %arg3[%c0_3, %c0_4] : memref<1x128xf32, #tpu.memory_space<vmem>>, vector<1x128xf32>
    %5 = vector.broadcast %4 : vector<1x128xf32> to vector<8x128xf32>
    %6 = arith.addf %3, %5 : vector<8x128xf32>
    %cst_5 = arith.constant 0.000000e+00 : f32
    %7 = vector.broadcast %cst_5 : f32 to vector<8x128xf32>
    %8 = arith.maximumf %6, %7 : vector<8x128xf32>
    %9 = arith.truncf %8 : vector<8x128xf32> to vector<8x128xbf16>
    %c0_6 = arith.constant 0 : index
    %c0_7 = arith.constant 0 : index
    %10 = vector.load %arg4[%c0_6, %c0_7] : memref<128x64xbf16, #tpu.memory_space<vmem>>, vector<128x64xbf16>
    %cst_8 = arith.constant dense<0.000000e+00> : vector<8x64xf32>
    %11 = tpu.matmul %9, %10, %cst_8 {dimension_numbers = #tpu.dot_dimension_numbers<[1], [0], [0], [1], [0, 0, 1, 1], [], []>} : vector<8x128xbf16>, vector<128x64xbf16>, vector<8x64xf32> -> vector<8x64xf32>
    %c0_9 = arith.constant 0 : index
    %c0_10 = arith.constant 0 : index
    %12 = vector.load %arg5[%c0_9, %c0_10] : memref<1x64xf32, #tpu.memory_space<vmem>>, vector<1x64xf32>
    %13 = vector.broadcast %12 : vector<1x64xf32> to vector<8x64xf32>
    %14 = arith.addf %11, %13 : vector<8x64xf32>
    %cst_11 = arith.constant 0.000000e+00 : f32
    %15 = vector.broadcast %cst_11 : f32 to vector<8x64xf32>
    %16 = arith.maximumf %14, %15 : vector<8x64xf32>
    %17 = arith.truncf %16 : vector<8x64xf32> to vector<8x64xbf16>
    %c0_12 = arith.constant 0 : index
    %c0_13 = arith.constant 0 : index
    %18 = vector.load %arg6[%c0_12, %c0_13] : memref<64x2xbf16, #tpu.memory_space<vmem>>, vector<64x2xbf16>
    %cst_14 = arith.constant dense<0.000000e+00> : vector<8x2xf32>
    %19 = tpu.matmul %17, %18, %cst_14 {dimension_numbers = #tpu.dot_dimension_numbers<[1], [0], [0], [1], [0, 0, 1, 1], [], []>} : vector<8x64xbf16>, vector<64x2xbf16>, vector<8x2xf32> -> vector<8x2xf32>
    %c0_15 = arith.constant 0 : index
    %c0_16 = arith.constant 0 : index
    %20 = vector.load %arg7[%c0_15, %c0_16] : memref<1x2xf32, #tpu.memory_space<vmem>>, vector<1x2xf32>
    %21 = vector.broadcast %20 : vector<1x2xf32> to vector<8x2xf32>
    %22 = arith.addf %19, %21 : vector<8x2xf32>
    %23 = vector.extract_strided_slice %22 {offsets = [0, 1], sizes = [8, 1], strides = [1, 1]} : vector<8x2xf32> to vector<8x1xf32>
    %24 = vector.extract_strided_slice %22 {offsets = [0, 0], sizes = [8, 1], strides = [1, 1]} : vector<8x2xf32> to vector<8x1xf32>
    %25 = arith.subf %23, %24 : vector<8x1xf32>
    %26 = tpu.iota {dimensions = array<i32: 1>} : vector<8x2xi32>
    %c0_i32 = arith.constant 0 : i32
    %27 = vector.broadcast %c0_i32 : i32 to vector<8x2xi32>
    %28 = arith.cmpi eq, %26, %27 : vector<8x2xi32>
    %cst_17 = arith.constant 0.000000e+00 : f32
    %29 = vector.broadcast %cst_17 : f32 to vector<8x1xf32>
    %30 = arith.subf %29, %25 : vector<8x1xf32>
    %31 = vector.shape_cast %25 : vector<8x1xf32> to vector<8x1xf32>
    %32 = vector.broadcast %31 : vector<8x1xf32> to vector<8x2xf32>
    %33 = vector.shape_cast %30 : vector<8x1xf32> to vector<8x1xf32>
    %34 = vector.broadcast %33 : vector<8x1xf32> to vector<8x2xf32>
    %35 = arith.select %28, %32, %34 : vector<8x2xi1>, vector<8x2xf32>
    %cst_18 = arith.constant 0.000000e+00 : f32
    %36 = vector.broadcast %cst_18 : f32 to vector<8x2xf32>
    %37 = arith.maximumf %35, %36 : vector<8x2xf32>
    %38 = math.absf %35 : vector<8x2xf32>
    %cst_19 = arith.constant 0.000000e+00 : f32
    %39 = vector.broadcast %cst_19 : f32 to vector<8x2xf32>
    %40 = arith.subf %39, %38 : vector<8x2xf32>
    %41 = math.exp %40 : vector<8x2xf32>
    %cst_20 = arith.constant 1.000000e+00 : f32
    %42 = vector.broadcast %cst_20 : f32 to vector<8x2xf32>
    %43 = arith.addf %42, %41 : vector<8x2xf32>
    %44 = math.log %43 : vector<8x2xf32>
    %45 = arith.addf %37, %44 : vector<8x2xf32>
    %cst_21 = arith.constant 0.000000e+00 : f32
    %46 = vector.broadcast %cst_21 : f32 to vector<8x2xf32>
    %47 = arith.subf %46, %45 : vector<8x2xf32>
    %c0_22 = arith.constant 0 : index
    %c0_23 = arith.constant 0 : index
    %48 = vector.load %arg8[%c0_22, %c0_23] : memref<8x2xf32, #tpu.memory_space<vmem>>, vector<8x2xf32>
    tpu.vector_store %arg8[%c0_22, %c0_23], %47 {strides = array<i32>} : memref<8x2xf32, #tpu.memory_space<vmem>>, vector<8x2xf32>,
    return
  }
  func.func @transform_0(%arg0: i32) -> (i32, i32) {
    %c0_i32 = arith.constant 0 : i32
    %c0_i32_0 = arith.constant 0 : i32
    return %arg0, %c0_i32 : i32, i32
  }
  func.func @transform_1(%arg0: i32) -> (i32, i32) {
    %c0_i32 = arith.constant 0 : i32
    %c0_i32_0 = arith.constant 0 : i32
    %c0_i32_1 = arith.constant 0 : i32
    return %c0_i32, %c0_i32_0 : i32, i32
  }
  func.func @transform_2(%arg0: i32) -> (i32, i32) {
    %c0_i32 = arith.constant 0 : i32
    %c0_i32_0 = arith.constant 0 : i32
    %c0_i32_1 = arith.constant 0 : i32
    return %c0_i32, %c0_i32_0 : i32, i32
  }
  func.func @transform_3(%arg0: i32) -> (i32, i32) {
    %c0_i32 = arith.constant 0 : i32
    %c0_i32_0 = arith.constant 0 : i32
    %c0_i32_1 = arith.constant 0 : i32
    return %c0_i32, %c0_i32_0 : i32, i32
  }
  func.func @transform_4(%arg0: i32) -> (i32, i32) {
    %c0_i32 = arith.constant 0 : i32
    %c0_i32_0 = arith.constant 0 : i32
    %c0_i32_1 = arith.constant 0 : i32
    return %c0_i32, %c0_i32_0 : i32, i32
  }
  func.func @transform_5(%arg0: i32) -> (i32, i32) {
    %c0_i32 = arith.constant 0 : i32
    %c0_i32_0 = arith.constant 0 : i32
    %c0_i32_1 = arith.constant 0 : i32
    return %c0_i32, %c0_i32_0 : i32, i32
  }
  func.func @transform_6(%arg0: i32) -> (i32, i32) {
    %c0_i32 = arith.constant 0 : i32
    %c0_i32_0 = arith.constant 0 : i32
    %c0_i32_1 = arith.constant 0 : i32
    return %c0_i32, %c0_i32_0 : i32, i32
  }
  func.func @transform_7(%arg0: i32) -> (i32, i32) {
    %c0_i32 = arith.constant 0 : i32
    %c0_i32_0 = arith.constant 0 : i32
    return %arg0, %c0_i32 : i32, i32
  }
}

</mosaic_0001>

<llo_original>
// kernel: tpu_custom_call.1
$region0: #{tpu_custom_call.1}
  #allocation0 [shape = 'u32[]', space=smem, size = 0x4, offset = 0x4, fixed_abs, tag = 'smem constant byte address 0x4 - core index']
  #allocation1 [shape = 'u32[72,128]{1,0:T(1,128)}', space=vmem, size = 0x9000, scoped, tag = 'internal scratch']
  %s0 = inlined_call_operand.vmem [shape: f32[8,48], index: 0, kind: input, shape index: {}]
  %s1 = inlined_call_operand.vmem [shape: bf16[48,128], index: 1, kind: input, shape index: {}]
  %s2 = inlined_call_operand.vmem [shape: f32[1,128], index: 2, kind: input, shape index: {}]
  %s3 = inlined_call_operand.vmem [shape: bf16[128,64], index: 3, kind: input, shape index: {}]
  %s4 = inlined_call_operand.vmem [shape: f32[1,64], index: 4, kind: input, shape index: {}]
  %s5 = inlined_call_operand.vmem [shape: bf16[64,2], index: 5, kind: input, shape index: {}]
  %s6 = inlined_call_operand.vmem [shape: f32[1,2], index: 6, kind: input, shape index: {}]
  %s7 = inlined_call_operand.vmem [shape: f32[8,2], index: 7, kind: output, shape index: {}]
  %s8 = sld [smem:[#allocation0]]
  $region38: #{tpu_custom_call.1} parent=0
    _
  %s10 = ssub.s32 1, %s8
  %s11 = scalar_select 0, %s10, %s8
  // Predicated region
  $region2: #{tpu_custom_call.1} parent=0 // pred_check
    _
  $region3: #{tpu_custom_call.1} parent=0 // pred_check_branch
    %13 = sbr.rel (0) target = $region5
  $region4: #{tpu_custom_call.1} parent=0 // pred_region
    _
  $region5: #{tpu_custom_call.1} parent=0 // pred_fallthru
    _
  // Predicated region
  $region6: #{tpu_custom_call.1} parent=0 // pred_check
    _
  $region7: #{tpu_custom_call.1} parent=0 // pred_check_branch
    %15 = sbr.rel (0) target = $region9
  $region8: #{tpu_custom_call.1} parent=0 // pred_region
    _
  $region9: #{tpu_custom_call.1} parent=0 // pred_fallthru
    _
  // Predicated region
  $region10: #{tpu_custom_call.1} parent=0 // pred_check
    _
  $region11: #{tpu_custom_call.1} parent=0 // pred_check_branch
    %17 = sbr.rel (0) target = $region13
  $region12: #{tpu_custom_call.1} parent=0 // pred_region
    _
  $region13: #{tpu_custom_call.1} parent=0 // pred_fallthru
    _
  // Predicated region
  $region14: #{tpu_custom_call.1} parent=0 // pred_check
    _
  $region15: #{tpu_custom_call.1} parent=0 // pred_check_branch
    %19 = sbr.rel (0) target = $region17
  $region16: #{tpu_custom_call.1} parent=0 // pred_region
    _
  $region17: #{tpu_custom_call.1} parent=0 // pred_fallthru
    _
  // Predicated region
  $region18: #{tpu_custom_call.1} parent=0 // pred_check
    _
  $region19: #{tpu_custom_call.1} parent=0 // pred_check_branch
    %21 = sbr.rel (0) target = $region21
  $region20: #{tpu_custom_call.1} parent=0 // pred_region
    _
  $region21: #{tpu_custom_call.1} parent=0 // pred_fallthru
    _
  // Predicated region
  $region22: #{tpu_custom_call.1} parent=0 // pred_check
    _
  $region23: #{tpu_custom_call.1} parent=0 // pred_check_branch
    %23 = sbr.rel (0) target = $region25
  $region24: #{tpu_custom_call.1} parent=0 // pred_region
    _
  $region25: #{tpu_custom_call.1} parent=0 // pred_fallthru
    _
  // Predicated region
  $region26: #{tpu_custom_call.1} parent=0 // pred_check
    _
  $region27: #{tpu_custom_call.1} parent=0 // pred_check_branch
    %25 = sbr.rel (0) target = $region29
  $region28: #{tpu_custom_call.1} parent=0 // pred_region
    _
  $region29: #{tpu_custom_call.1} parent=0 // pred_fallthru
    _
  %v27 = vld [vmem:[%s0] sm:$0xff]
  %v28 = vpack.c.bf16 %v27, %v27
  %v29 = vld [vmem:[%s1] sm:$0xf]
  %v30 = vld [vmem:[%s1 + $0x4] sm:$0xf]
  %v31 = vld [vmem:[%s1 + $0x8] sm:$0xf]
  %v32 = vld [vmem:[%s1 + $0xc] sm:$0xf]
  %v33 = vld [vmem:[%s1 + $0x10] sm:$0xf]
  %v34 = vld [vmem:[%s1 + $0x14] sm:$0xf]
  %v35 = vld [vmem:[%s2] sm:$0x1]
  %v37 = vperm.slane %v35, 0
  %v45 = vunpack.c.l.b16 %v29
  %v46 = vunpack.c.l.b16 %v30
  %v47 = vunpack.c.l.b16 %v31
  %v48 = vunpack.c.l.b16 %v32
  %v49 = vunpack.c.l.b16 %v33
  %v50 = vunpack.c.l.b16 %v34
  %v51 = vpack.c.b16 %v46, %v45
  %v52 = vpack.c.b16 %v48, %v47
  %v53 = vpack.c.b16 %v50, %v49
  %vm57 = vcmask 392192
  %v59 = vsel %vm57, %v28, 0
  %61 = vmatpush.bf16.msra.mxu0 0
  %62 = vmatpush.bf16.msra.mxu0 0
  %63 = vmatpush.bf16.msra.mxu0 0
  %64 = vmatpush.bf16.msra.mxu0 0
  %65 = vmatpush.bf16.msra.mxu0 0
  %66 = vmatpush.bf16.msra.mxu0 %v53
  %67 = vmatpush.bf16.msra.mxu0 %v52
  %68 = vmatpush.bf16.msra.mxu0 %v51
  %69 = vmatmul.bf16.gmra.mxu0 %v59
  %v70 = vpop.f32.mrf.mxu0
  %v71 = vadd.f32 %v37, %v70
  %v72 = vpop.f32.mrf.mxu0
  %73 = vdwg.mxu0
  %v74 = vmax.f32 %v71, 0.0
  %v75 = vpack.c.bf16 %v74, %v74
  %v76 = vld [vmem:[%s3] sm:$0xf]
  %v77 = vld [vmem:[%s3 + $0x4] sm:$0xf]
  %v78 = vld [vmem:[%s3 + $0x8] sm:$0xf]
  %v79 = vld [vmem:[%s3 + $0xc] sm:$0xf]
  %v80 = vld [vmem:[%s3 + $0x10] sm:$0xf]
  %v81 = vld [vmem:[%s3 + $0x14] sm:$0xf]
  %v82 = vld [vmem:[%s3 + $0x18] sm:$0xf]
  %v83 = vld [vmem:[%s3 + $0x1c] sm:$0xf]
  %v84 = vld [vmem:[%s3 + $0x20] sm:$0xf]
  %v85 = vld [vmem:[%s3 + $0x24] sm:$0xf]
  %v86 = vld [vmem:[%s3 + $0x28] sm:$0xf]
  %v87 = vld [vmem:[%s3 + $0x2c] sm:$0xf]
  %v88 = vld [vmem:[%s3 + $0x30] sm:$0xf]
  %v89 = vld [vmem:[%s3 + $0x34] sm:$0xf]
  %v90 = vld [vmem:[%s3 + $0x38] sm:$0xf]
  %v91 = vld [vmem:[%s3 + $0x3c] sm:$0xf]
  %v92 = vld [vmem:[%s4] sm:$0x1]
  %v94 = vperm.slane %v92, 0
  %v112 = vunpack.c.l.b16 %v76
  %v113 = vunpack.c.l.b16 %v77
  %v114 = vunpack.c.l.b16 %v78
  %v115 = vunpack.c.l.b16 %v79
  %v116 = vunpack.c.l.b16 %v80
  %v117 = vunpack.c.l.b16 %v81
  %v118 = vunpack.c.l.b16 %v82
  %v119 = vunpack.c.l.b16 %v83
  %v120 = vunpack.c.l.b16 %v84
  %v121 = vunpack.c.l.b16 %v85
  %v122 = vunpack.c.l.b16 %v86
  %v123 = vunpack.c.l.b16 %v87
  %v124 = vunpack.c.l.b16 %v88
  %v125 = vunpack.c.l.b16 %v89
  %v126 = vunpack.c.l.b16 %v90
  %v127 = vunpack.c.l.b16 %v91
  %v128 = vpack.c.b16 %v113, %v112
  %v129 = vpack.c.b16 %v115, %v114
  %v130 = vpack.c.b16 %v117, %v116
  %v131 = vpack.c.b16 %v119, %v118
  %v132 = vpack.c.b16 %v121, %v120
  %v133 = vpack.c.b16 %v123, %v122
  %v134 = vpack.c.b16 %v125, %v124
  %v135 = vpack.c.b16 %v127, %v126
  %144 = vmatpush.bf16.msra.mxu0 %v135
  %145 = vmatpush.bf16.msra.mxu0 %v134
  %146 = vmatpush.bf16.msra.mxu0 %v133
  %147 = vmatpush.bf16.msra.mxu0 %v132
  %148 = vmatpush.bf16.msra.mxu0 %v131
  %149 = vmatpush.bf16.msra.mxu0 %v130
  %150 = vmatpush.bf16.msra.mxu0 %v129
  %151 = vmatpush.bf16.msra.mxu0 %v128
  %152 = vmatmul.bf16.gmra.mxu0 %v75
  %v153 = vpop.f32.mrf.mxu0
  %v154 = vadd.f32 %v94, %v153
  %v155 = vpop.f32.mrf.mxu0
  %156 = vdwg.mxu0
  %v157 = vmax.f32 %v154, 0.0
  %v158 = vpack.c.bf16 %v157, %v157
  %v159 = vld [vmem:[%s5] sm:$0xf]
  %v160 = vld [vmem:[%s5 + $0x4] sm:$0xf]
  %v161 = vld [vmem:[%s5 + $0x8] sm:$0xf]
  %v162 = vld [vmem:[%s5 + $0xc] sm:$0xf]
  %v163 = vld [vmem:[%s5 + $0x10] sm:$0xf]
  %v164 = vld [vmem:[%s5 + $0x14] sm:$0xf]
  %v165 = vld [vmem:[%s5 + $0x18] sm:$0xf]
  %v166 = vld [vmem:[%s5 + $0x1c] sm:$0xf]
  %v167 = vld [vmem:[%s6] sm:$0x1]
  %v169 = vperm.slane %v167, 0
  %v179 = vunpack.c.l.b16 %v159
  %v180 = vunpack.c.l.b16 %v160
  %v181 = vunpack.c.l.b16 %v161
  %v182 = vunpack.c.l.b16 %v162
  %v183 = vunpack.c.l.b16 %v163
  %v184 = vunpack.c.l.b16 %v164
  %v185 = vunpack.c.l.b16 %v165
  %v186 = vunpack.c.l.b16 %v166
  %v187 = vpack.c.b16 %v180, %v179
  %v188 = vpack.c.b16 %v182, %v181
  %v189 = vpack.c.b16 %v184, %v183
  %v190 = vpack.c.b16 %v186, %v185
  %vm195 = vcmask 523264
  %v197 = vsel %vm195, %v158, 0
  %199 = vmatpush.bf16.msra.mxu0 0
  %200 = vmatpush.bf16.msra.mxu0 0
  %201 = vmatpush.bf16.msra.mxu0 0
  %202 = vmatpush.bf16.msra.mxu0 0
  %203 = vmatpush.bf16.msra.mxu0 %v190
  %204 = vmatpush.bf16.msra.mxu0 %v189
  %205 = vmatpush.bf16.msra.mxu0 %v188
  %206 = vmatpush.bf16.msra.mxu0 %v187
  %207 = vmatmul.bf16.gmra.mxu0 %v197
  %v208 = vpop.f32.mrf.mxu0
  %v209 = vadd.f32 %v169, %v208
  %v210 = vpop.f32.mrf.mxu0
  %211 = vdwg.mxu0
  %213 = vrot.lane.b32.xlu0 %v209, 1
  %v214 = vpop.permute.xlu0 %213
  %v216 = vsub.f32 %v209, %v214
  %v217 = vlaneseq
  %v218 = vand.u32 %v217, 127
  %vm219 = vcmp.eq.s32.totalorder %v218, 0
  %v220 = vsub.f32 0.0, %v216
  %222 = vset.pattern.permute.xlu0 1
  %223 = vperm.xlu0 %222, %v216
  %v224 = vpop.permute.xlu0 %223
  %227 = vset.pattern.permute.xlu0 1
  %228 = vperm.xlu0 %227, %v220
  %v229 = vpop.permute.xlu0 %228
  %v231 = vsel %vm219, %v224, %v229
  %v232 = vmax.f32 %v231, 0.0
  %v233 = vand.u32 2147483647, %v231
  %v234 = vsub.f32 0.0, %v233
  %v235 = vmul.f32 %v234, 1.442695
  %v236 = vpow.pop %v235
  %v237 = vadd.f32 %v236, 1.0
  %v238 = vlog2.pop %v237
  %v239 = vmul.f32 %v238, 0.6931472
  %v240 = vadd.f32 %v232, %v239
  %v241 = vsub.f32 0.0, %v240
  %vm242 = vcmask 15360
  %243 = vst.msk [vmem:[%s7] sm:$0xff] %vm242, %v241
  // Predicated region
  $region30: #{tpu_custom_call.1} parent=0 // pred_check
    _
  $region31: #{tpu_custom_call.1} parent=0 // pred_check_branch
    %245 = sbr.rel (0) target = $region33
  $region32: #{tpu_custom_call.1} parent=0 // pred_region
    _
  $region33: #{tpu_custom_call.1} parent=0 // pred_fallthru
    _
  // Predicated region
  $region34: #{tpu_custom_call.1} parent=0 // pred_check
    _
  $region35: #{tpu_custom_call.1} parent=0 // pred_check_branch
    %247 = sbr.rel (0) target = $region37
  $region36: #{tpu_custom_call.1} parent=0 // pred_region
    _
  $region37: #{tpu_custom_call.1} parent=0 // pred_fallthru
    _

</llo_original>
